<compile_context>
chip_gen: v6e
topology: v6e:2x2x1
jax: 0.10.0
libtpu: 0.0.40
codegen_flags: <defaults>
</compile_context>

<pallas_src>
import jax
import jax.numpy as jnp
from jax.experimental import pallas as pl
from jax.experimental.pallas import tpu as pltpu


def _model_kernel(p_ref, x_ref, o_ref):
    # p_ref: SMEM f32[6] = [w1[0,0], w1[0,1], wc[0,0], b1[0,0], b1[0,1], bc[0,0]]
    # x_ref: VMEM f32[B, 1]
    # o_ref: VMEM f32[B, 2]
    x = x_ref[...]                              # (B, 1)
    w10 = p_ref[0]
    w11 = p_ref[1]
    wc = p_ref[2]
    b10 = p_ref[3]
    b11 = p_ref[4]
    bc = p_ref[5]

    B = x.shape[0]
    # Column-index mask to lay the two output columns of the (1->2) linear
    # into one (B, 2) vreg tile without any MXU or lane-concat traffic.
    col = jax.lax.broadcasted_iota(jnp.int32, (B, 2), 1)
    w_row = jnp.where(col == 0, w10, w11)       # (B, 2) broadcast of weights
    b_row = jnp.where(col == 0, b10, b11)       # (B, 2) broadcast of biases

    v1 = x * w_row + b_row                      # Linear(1, 2): (B, 2)
    v2 = jnp.clip(x * wc + bc, 0.0, 6.0)        # clamp(Linear(1, 1)), (B, 1)
    v3 = v2 + 3.0
    o_ref[...] = (v1 * v3) * (1.0 / 6.0)        # broadcast (B,1) over (B,2)


def model_forward(x, w1, b1, wc, bc):
    """x: (B, 1) f32; w1: (1, 2); b1: (1, 2); wc: (1, 1); bc: (1, 1)."""
    B, F = x.shape
    assert F == 1, "kernel is specialized for n_features == 1 (per the module)"
    # Pack the 6 parameter scalars into a single SMEM operand.
    params = jnp.concatenate(
        [w1.reshape(-1), wc.reshape(-1), b1.reshape(-1), bc.reshape(-1)]
    ).astype(jnp.float32)                       # (6,)

    return pl.pallas_call(
        _model_kernel,
        out_shape=jax.ShapeDtypeStruct((B, 2), jnp.float32),
        # No grid: single invocation, whole arrays as blocks.
        in_specs=[
            pl.BlockSpec(memory_space=pltpu.MemorySpace.SMEM),   # packed params
            pl.BlockSpec(memory_space=pltpu.MemorySpace.VMEM),   # x
        ],
        out_specs=pl.BlockSpec(memory_space=pltpu.MemorySpace.VMEM),
    )(params, x)
    # TODO(synk): if B grows beyond toy size, add a 'parallel' grid axis over B
    # (row blocks multiple of 8) and present a lane-dense output layout.


def _reference(x, w1, b1, wc, bc):
    v1 = x @ w1 + b1
    v2 = jnp.clip(x @ wc + bc, 0.0, 6.0)
    return (v1 * (v2 + 3.0)) / 6.0


if __name__ == "__main__":
    # Module __init__: n_features = 1 -> Linear(1, 2) and Linear(1, 1).
    B = 8
    F = 1

    key = jax.random.PRNGKey(0)
    kx, kw1, kb1, kwc, kbc = jax.random.split(key, 5)

    x = jax.random.normal(kx, (B, F), dtype=jnp.float32)
    # Deterministic parameter init (uniform, roughly matching nn.Linear's scale).
    bound = 1.0 / (F ** 0.5)
    w1 = jax.random.uniform(kw1, (F, 2), jnp.float32, -bound, bound)
    b1 = jax.random.uniform(kb1, (1, 2), jnp.float32, -bound, bound)
    wc = jax.random.uniform(kwc, (F, 1), jnp.float32, -bound, bound)
    bc = jax.random.uniform(kbc, (1, 1), jnp.float32, -bound, bound)

    out = model_forward(x, w1, b1, wc, bc)
    jax.block_until_ready(out)

    ref = _reference(x, w1, b1, wc, bc)
    assert out.shape == (B, 2)
    assert jnp.allclose(out, ref, atol=1e-5, rtol=1e-5)

    print("KERNEL_OK")
</pallas_src>

<mosaic_0001>
module attributes {stable_mosaic.version = 11 : i64} {
  func.func @_model_kernel(%arg0: memref<6xf32, #tpu.memory_space<smem>>, %arg1: memref<8x1xf32, #tpu.memory_space<vmem>>, %arg2: memref<8x2xf32, #tpu.memory_space<vmem>>) attributes {dimension_semantics = [], scalar_prefetch = 0 : i64, scratch_operands = 0 : i64, tpu.core_type = #tpu.core_type<tc>} {
    %c0 = arith.constant 0 : index
    %c0_0 = arith.constant 0 : index
    %0 = vector.load %arg1[%c0, %c0_0] : memref<8x1xf32, #tpu.memory_space<vmem>>, vector<8x1xf32>
    %c0_1 = arith.constant 0 : index
    %1 = memref.load %arg0[%c0_1] : memref<6xf32, #tpu.memory_space<smem>>
    %c1 = arith.constant 1 : index
    %2 = memref.load %arg0[%c1] : memref<6xf32, #tpu.memory_space<smem>>
    %c2 = arith.constant 2 : index
    %3 = memref.load %arg0[%c2] : memref<6xf32, #tpu.memory_space<smem>>
    %c3 = arith.constant 3 : index
    %4 = memref.load %arg0[%c3] : memref<6xf32, #tpu.memory_space<smem>>
    %c4 = arith.constant 4 : index
    %5 = memref.load %arg0[%c4] : memref<6xf32, #tpu.memory_space<smem>>
    %c5 = arith.constant 5 : index
    %6 = memref.load %arg0[%c5] : memref<6xf32, #tpu.memory_space<smem>>
    %7 = tpu.iota {dimensions = array<i32: 1>} : vector<8x2xi32>
    %c0_i32 = arith.constant 0 : i32
    %8 = vector.broadcast %c0_i32 : i32 to vector<8x2xi32>
    %9 = arith.cmpi eq, %7, %8 : vector<8x2xi32>
    %10 = vector.broadcast %1 : f32 to vector<8x2xf32>
    %11 = vector.broadcast %2 : f32 to vector<8x2xf32>
    %12 = arith.select %9, %10, %11 : vector<8x2xi1>, vector<8x2xf32>
    %c0_i32_2 = arith.constant 0 : i32
    %13 = vector.broadcast %c0_i32_2 : i32 to vector<8x2xi32>
    %14 = arith.cmpi eq, %7, %13 : vector<8x2xi32>
    %15 = vector.broadcast %4 : f32 to vector<8x2xf32>
    %16 = vector.broadcast %5 : f32 to vector<8x2xf32>
    %17 = arith.select %14, %15, %16 : vector<8x2xi1>, vector<8x2xf32>
    %18 = vector.broadcast %0 : vector<8x1xf32> to vector<8x2xf32>
    %19 = arith.mulf %18, %12 : vector<8x2xf32>
    %20 = arith.addf %19, %17 : vector<8x2xf32>
    %21 = vector.broadcast %3 : f32 to vector<8x1xf32>
    %22 = arith.mulf %0, %21 : vector<8x1xf32>
    %23 = vector.broadcast %6 : f32 to vector<8x1xf32>
    %24 = arith.addf %22, %23 : vector<8x1xf32>
    %cst = arith.constant 0.000000e+00 : f32
    %cst_3 = arith.constant 6.000000e+00 : f32
    %25 = vector.broadcast %cst : f32 to vector<8x1xf32>
    %26 = arith.maximumf %25, %24 : vector<8x1xf32>
    %27 = vector.broadcast %cst_3 : f32 to vector<8x1xf32>
    %28 = arith.minimumf %27, %26 : vector<8x1xf32>
    %cst_4 = arith.constant 3.000000e+00 : f32
    %29 = vector.broadcast %cst_4 : f32 to vector<8x1xf32>
    %30 = arith.addf %28, %29 : vector<8x1xf32>
    %31 = vector.broadcast %30 : vector<8x1xf32> to vector<8x2xf32>
    %32 = arith.mulf %20, %31 : vector<8x2xf32>
    %cst_5 = arith.constant 0.166666672 : f32
    %33 = vector.broadcast %cst_5 : f32 to vector<8x2xf32>
    %34 = arith.mulf %32, %33 : vector<8x2xf32>
    %c0_6 = arith.constant 0 : index
    %c0_7 = arith.constant 0 : index
    %35 = vector.load %arg2[%c0_6, %c0_7] : memref<8x2xf32, #tpu.memory_space<vmem>>, vector<8x2xf32>
    tpu.vector_store %arg2[%c0_6, %c0_7], %34 {strides = array<i32>} : memref<8x2xf32, #tpu.memory_space<vmem>>, vector<8x2xf32>,
    return
  }
}

</mosaic_0001>

<llo_original>
// kernel: tpu_custom_call.1
$region0: #{tpu_custom_call.1}
  #allocation0 [shape = 'u32[]', space=smem, size = 0x4, offset = 0x4, fixed_abs, tag = 'smem constant byte address 0x4 - core index']
  #allocation1 [shape = 'u32[144,128]{1,0:T(1,128)}', space=vmem, size = 0x12000, scoped, tag = 'internal scratch']
  %s0 = inlined_call_operand.vmem [shape: f32[6], index: 0, kind: input, shape index: {}]
  %s1 = inlined_call_operand.vmem [shape: f32[8,1], index: 1, kind: input, shape index: {}]
  %s2 = inlined_call_operand.vmem [shape: f32[8,2], index: 2, kind: output, shape index: {}]
  %s3 = sld [smem:[#allocation0]]
  $region22: #{tpu_custom_call.1} parent=0
    _
  %s5 = ssub.s32 1, %s3
  %s6 = scalar_select 0, %s5, %s3
  $region1: #{tpu_custom_call.1} parent=0
    #allocation2 [shape = 'u8[512]{0}', space=smem, size = 0x200, scoped, tag = 'input window, operand 0, single buffered']
    #allocation3 [shape = 's32[1]{0}', space=sflag, size = 0x4, scoped, tag = 'scoped memory for tpu_custom_call.1']
    %7 = vsyncpa [#allocation3], 0
    // Predicated region
    $region2: #{tpu_custom_call.1} parent=1 // pred_check
      _
    $region3: #{tpu_custom_call.1} parent=1 // pred_check_branch
      %9 = sbr.rel (0) target = $region5
    $region4: #{tpu_custom_call.1} parent=1 // pred_region
      %s11 = ssub.s32 16, 16
      %12 = vsyncadd [#allocation3], %s11
      %s14 = sshll.u32 %s0, 4
      %s15 = int_to_ptr.vmem [resolvable:$true] %s14
      %17 = dma.vmem_to_smem %s15, 16, [#allocation2], [#allocation3]
    $region5: #{tpu_custom_call.1} parent=1 // pred_fallthru
      _
    // Predicated region
    $region6: #{tpu_custom_call.1} parent=1 // pred_check
      _
    $region7: #{tpu_custom_call.1} parent=1 // pred_check_branch
      %19 = sbr.rel (0) target = $region9
    $region8: #{tpu_custom_call.1} parent=1 // pred_region
      _
    $region9: #{tpu_custom_call.1} parent=1 // pred_fallthru
      _
    // Predicated region
    $region10: #{tpu_custom_call.1} parent=1 // pred_check
      _
    $region11: #{tpu_custom_call.1} parent=1 // pred_check_branch
      %21 = sbr.rel (0) target = $region13
    $region12: #{tpu_custom_call.1} parent=1 // pred_region
      %22 = dma.done [#allocation3], 16
    $region13: #{tpu_custom_call.1} parent=1 // pred_fallthru
      _
    %23 = sfence
    %v24 = vld [vmem:[%s1] sm:$0xff]
    %s25 = sld [smem:[#allocation2]]
    %s26 = sld [smem:[#allocation2 + $0x1]]
    %s27 = sld [smem:[#allocation2 + $0x2]]
    %s28 = sld [smem:[#allocation2 + $0x3]]
    %s29 = sld [smem:[#allocation2 + $0x4]]
    %s30 = sld [smem:[#allocation2 + $0x5]]
    %v31 = vlaneseq
    %v32 = vand.u32 %v31, 127
    %vm33 = vcmp.eq.s32.totalorder %v32, 0
    %v34 = vstv %s25
    %v35 = vstv %s26
    %v36 = vsel %vm33, %v34, %v35
    %v37 = vstv %s28
    %v38 = vstv %s29
    %v39 = vsel %vm33, %v37, %v38
    %41 = vset.pattern.permute.xlu0 0
    %42 = vperm.xlu0 %41, %v24
    %v43 = vpop.permute.xlu0 %42
    %v45 = vmul.f32 %v43, %v36
    %v46 = vadd.f32 %v45, %v39
    %v47 = vstv %s27
    %v48 = vmul.f32 %v24, %v47
    %v49 = vstv %s30
    %v50 = vadd.f32 %v48, %v49
    %v51 = vmax.f32 %v50, 0.0
    %v52 = vmin.f32 %v51, 6.0
    %v53 = vadd.f32 %v52, 3.0
    %55 = vset.pattern.permute.xlu0 0
    %56 = vperm.xlu0 %55, %v53
    %v57 = vpop.permute.xlu0 %56
    %v59 = vmul.f32 %v46, %v57
    %v60 = vmul.f32 %v59, 0.16666667
    %vm61 = vcmask 15360
    %62 = vst.msk [vmem:[%s2] sm:$0xff] %vm61, %v60
    // Predicated region
    $region14: #{tpu_custom_call.1} parent=1 // pred_check
      _
    $region15: #{tpu_custom_call.1} parent=1 // pred_check_branch
      %64 = sbr.rel (0) target = $region17
    $region16: #{tpu_custom_call.1} parent=1 // pred_region
      _
    $region17: #{tpu_custom_call.1} parent=1 // pred_fallthru
      _
    // Predicated region
    $region18: #{tpu_custom_call.1} parent=1 // pred_check
      _
    $region19: #{tpu_custom_call.1} parent=1 // pred_check_branch
      %66 = sbr.rel (0) target = $region21
    $region20: #{tpu_custom_call.1} parent=1 // pred_region
      _
    $region21: #{tpu_custom_call.1} parent=1 // pred_fallthru
      _
    %67 = vsyncpa [#allocation3], 1

</llo_original>
